<compile_context>
chip_gen: v7x
topology: tpu7x:2x2x1
jax: 0.10.0
libtpu: 0.0.40
codegen_flags: <defaults>
</compile_context>

<pallas_src>
import functools

import jax
import jax.numpy as jnp
from jax.experimental import pallas as pl
from jax.experimental.pallas import tpu as pltpu


def _round_up(x: int, m: int) -> int:
    return pl.cdiv(x, m) * m


def _vmem_limit_bytes() -> int:
    """~80% of physical VMEM (leaves compiler-scratch headroom)."""
    try:
        cap = int(pltpu.get_tpu_info().vmem_capacity_bytes)
    except Exception:
        cap = 128 * 1024 * 1024  # v5e/v6e default if query unavailable
    return int(cap * 0.8)


def elm_kernel(x_ref, w1_ref, b1_ref, w2_ref, b2_ref, o_ref, acc_ref):
    k = pl.program_id(1)

    @pl.when(k == 0)
    def _():
        acc_ref[...] = jnp.zeros_like(acc_ref)

    # fc1 slab for this hidden tile: (TB, In) @ (In, THp), f32 accumulate (MXU).
    x = x_ref[...].astype(w1_ref.dtype)
    h = jnp.dot(x, w1_ref[...], preferred_element_type=jnp.float32)
    # Sigmoid constants are folded into the weights at prep time, so the body
    # is a bare tanh (runs on the EUP slot; no extra VPU mul/add).
    t = jnp.tanh(h + b1_ref[...])
    # fc2 partial product for this hidden tile, f32 accumulate.
    acc_ref[...] += jnp.dot(t.astype(w2_ref.dtype), w2_ref[...],
                            preferred_element_type=jnp.float32)

    @pl.when(k == pl.num_programs(1) - 1)
    def _():
        o_ref[...] = (acc_ref[...] + b2_ref[...]).astype(o_ref.dtype)


def prepare_elm_params(w1, b1, w2, b2, matmul_dtype=jnp.bfloat16):
    """One-time prep: transpose, fold sigmoid constants, pad to 128 lanes, cast.

    w1: (H, In), b1: (H,), w2: (Out, H), b2: (Out,)  [PyTorch nn.Linear layout]

    Using sigmoid(z) = 0.5*tanh(0.5*z) + 0.5, the forward pass is *exactly*
        y = tanh(x @ (0.5*W1^T) + 0.5*b1) @ (0.5*W2^T) + (b2 + 0.5*sum_h W2).
    Hidden/output features are zero-padded to a multiple of 128 so all stores
    are lane-dense; padded hidden columns give tanh(0)=0 into zero W2 rows and
    contribute nothing, padded output lanes are sliced off by the wrapper.
    """
    H, In = w1.shape
    Out = w2.shape[0]
    # NOTE: at real (non-toy) sizes on v6e/v7x prefer padding H to a multiple
    # of 256 (MXU is 2x256x256); Out stays at the minimal 128-multiple since
    # padding it inflates HBM write traffic.
    Hp = _round_up(H, 128)
    Outp = _round_up(Out, 128)

    w1t = jnp.zeros((In, Hp), matmul_dtype).at[:, :H].set(
        (0.5 * w1.T).astype(matmul_dtype))
    b1r = jnp.zeros((1, Hp), jnp.float32).at[:, :H].set(
        0.5 * b1.astype(jnp.float32))
    w2t = jnp.zeros((Hp, Outp), matmul_dtype).at[:H, :Out].set(
        (0.5 * w2.T).astype(matmul_dtype))
    b2r = jnp.zeros((1, Outp), jnp.float32).at[:, :Out].set(
        b2.astype(jnp.float32) + 0.5 * w2.astype(jnp.float32).sum(axis=1))

    return {"w1t": w1t, "b1": b1r, "w2t": w2t, "b2": b2r,
            "out_features": int(Out)}


def _choose_batch_tile(Bp: int, block_b: int) -> int:
    """Largest multiple-of-8 divisor of Bp (<= cap).  Capped so there are >=2
    grid steps when Bp >= 16 (v7x second TensorCore + pipeline overlap)."""
    cap = min(block_b, Bp)
    if Bp >= 16:
        cap = min(cap, max(8, _round_up(Bp // 2, 8)))
    best = 8
    for t in range(8, cap + 1, 8):
        if Bp % t == 0:
            best = t
    return best


def _choose_hidden_tile(In, Hp, Outp, TB, w_itemsize, budget) -> int:
    """Largest multiple-of-128 divisor of Hp whose working set fits `budget`.
    Full weight residency (THp == Hp) preferred; otherwise fc2 is accumulated
    over hidden tiles on the grid's k axis."""
    best = 128
    for thp in range(128, Hp + 1, 128):
        if Hp % thp:
            continue
        nk = Hp // thp
        nbuf = 1 if nk == 1 else 2           # Buffered(1) only when resident
        wbytes = nbuf * ((In * thp + thp * Outp) * w_itemsize
                         + (thp + Outp) * 4)               # weights + f32 biases
        iobytes = (2 * TB * In + 2 * TB * Outp) * 4        # pipelined x / out
        scratch = (TB * Outp + TB * thp) * 4               # f32 acc + fc1 slab
        if wbytes + iobytes + scratch <= budget:
            best = thp
    return best


@functools.partial(jax.jit, static_argnames=("out_features", "block_b"))
def _elm_forward_impl(x, w1t, b1r, w2t, b2r, *, out_features, block_b):
    B, In = x.shape
    Hp = w1t.shape[1]
    Outp = w2t.shape[1]

    # Pad only to the 8-row sublane granule (at most 7 rows); TB is then a
    # divisor of Bp, so no ragged-tile pad copy is ever needed.
    Bp = _round_up(B, 8)
    if Bp != B:
        x = jnp.zeros((Bp, In), x.dtype).at[:B].set(x)
    TB = _choose_batch_tile(Bp, block_b)
    nb = Bp // TB

    vmem_limit = _vmem_limit_bytes()
    THp = _choose_hidden_tile(In, Hp, Outp, TB,
                              jnp.dtype(w1t.dtype).itemsize,
                              int(vmem_limit * 0.75))
    nk = Hp // THp

    # Constant-index weight/bias blocks (nk == 1) are single-buffered to halve
    # their VMEM cost; when the hidden dim is tiled keep default double
    # buffering so the per-k weight DMA overlaps the matmuls.
    wkw = {"pipeline_mode": pl.Buffered(1)} if nk == 1 else {}

    out_padded = pl.pallas_call(
        elm_kernel,
        out_shape=jax.ShapeDtypeStruct((Bp, Outp), x.dtype),
        grid=(nb, nk),
        in_specs=[
            pl.BlockSpec((TB, In), lambda i, k: (i, 0)),            # x tile
            pl.BlockSpec((In, THp), lambda i, k: (0, k), **wkw),    # 0.5*W1^T
            pl.BlockSpec((1, THp), lambda i, k: (0, k), **wkw),     # 0.5*b1
            pl.BlockSpec((THp, Outp), lambda i, k: (k, 0), **wkw),  # 0.5*W2^T
            pl.BlockSpec((1, Outp), lambda i, k: (0, 0), **wkw),    # b2'
        ],
        out_specs=pl.BlockSpec((TB, Outp), lambda i, k: (i, 0)),
        scratch_shapes=[pltpu.VMEM((TB, Outp), jnp.float32)],
        compiler_params=pltpu.CompilerParams(
            dimension_semantics=("parallel", "arbitrary"),
            vmem_limit_bytes=vmem_limit,
        ),
    )(x, w1t, b1r, w2t, b2r)

    # Static-int slicing (out_features is a static jit arg) -> no traced slice.
    return out_padded[:B, :out_features]


def elm_forward(x, params, *, block_b=512):
    """x: (B, In) float32; params from prepare_elm_params."""
    return _elm_forward_impl(x, params["w1t"], params["b1"],
                             params["w2t"], params["b2"],
                             out_features=params["out_features"],
                             block_b=block_b)


if __name__ == "__main__":
    # Small shapes consistent with the module: batch=8, in=32, hidden=64, out=16.
    B, IN, HID, OUT = 8, 32, 64, 16

    key = jax.random.PRNGKey(0)
    kx, kw1, kb1, kw2, kb2 = jax.random.split(key, 5)

    x = jax.random.normal(kx, (B, IN), dtype=jnp.float32)
    # Deterministic init mimicking nn.Linear's uniform(-1/sqrt(fan_in), +...)
    lim1 = 1.0 / jnp.sqrt(IN)
    lim2 = 1.0 / jnp.sqrt(HID)
    w1 = jax.random.uniform(kw1, (HID, IN), jnp.float32, -lim1, lim1)
    b1 = jax.random.uniform(kb1, (HID,), jnp.float32, -lim1, lim1)
    w2 = jax.random.uniform(kw2, (OUT, HID), jnp.float32, -lim2, lim2)
    b2 = jax.random.uniform(kb2, (OUT,), jnp.float32, -lim2, lim2)

    # Pure-JAX reference.
    ref = jax.nn.sigmoid(x @ w1.T + b1) @ w2.T + b2

    # f32 matmul-operand path: exactness check.
    params_f32 = prepare_elm_params(w1, b1, w2, b2, matmul_dtype=jnp.float32)
    out_f32 = jax.block_until_ready(elm_forward(x, params_f32))
    assert out_f32.shape == (B, OUT)
    assert jnp.allclose(out_f32, ref, atol=1e-4, rtol=1e-4), "f32 mismatch vs reference"

    # bf16 matmul-operand path (perf default for v5e/v6e/v7x MXU): loose tolerance.
    params_bf16 = prepare_elm_params(w1, b1, w2, b2)  # bf16 default
    out_bf16 = jax.block_until_ready(elm_forward(x, params_bf16))
    assert out_bf16.shape == (B, OUT)
    assert jnp.allclose(out_bf16, ref, atol=3e-2, rtol=3e-2), "bf16 mismatch vs reference"

    print("KERNEL_OK")
</pallas_src>

<mosaic_0001>
module attributes {stable_mosaic.version = 11 : i64} {
  func.func @elm_kernel(%arg0: i32, %arg1: i32, %arg2: memref<8x32xf32, #tpu.memory_space<vmem>>, %arg3: memref<32x128xf32, #tpu.memory_space<vmem>>, %arg4: memref<1x128xf32, #tpu.memory_space<vmem>>, %arg5: memref<128x128xf32, #tpu.memory_space<vmem>>, %arg6: memref<1x128xf32, #tpu.memory_space<vmem>>, %arg7: memref<8x128xf32, #tpu.memory_space<vmem>>, %arg8: memref<8x128xf32, #tpu.memory_space<vmem>>) attributes {dimension_semantics = [#tpu.dimension_semantics<parallel>, #tpu.dimension_semantics<arbitrary>], iteration_bounds = array<i64: 1, 1>, scalar_prefetch = 0 : i64, scratch_operands = 1 : i64, tpu.core_type = #tpu.core_type<tc>, window_params = [{transform_indices = @transform_0, window_bounds = array<i64: 8, 32>}, {pipeline_mode = #tpu.pipeline_mode<synchronous>, transform_indices = @transform_1, window_bounds = array<i64: 32, 128>}, {pipeline_mode = #tpu.pipeline_mode<synchronous>, transform_indices = @transform_2, window_bounds = array<i64: 1, 128>}, {pipeline_mode = #tpu.pipeline_mode<synchronous>, transform_indices = @transform_3, window_bounds = array<i64: 128, 128>}, {pipeline_mode = #tpu.pipeline_mode<synchronous>, transform_indices = @transform_4, window_bounds = array<i64: 1, 128>}, {transform_indices = @transform_5, window_bounds = array<i64: 8, 128>}]} {
    %c0_i32 = arith.constant 0 : i32
    %0 = arith.cmpi eq, %arg1, %c0_i32 : i32
    %1 = arith.extui %0 : i1 to i32
    %c0_i32_0 = arith.constant 0 : i32
    %2 = arith.cmpi ne, %1, %c0_i32_0 : i32
    scf.if %2 {
      %cst_15 = arith.constant 0.000000e+00 : f32
      %18 = vector.broadcast %cst_15 : f32 to vector<8x128xf32>
      %c0_16 = arith.constant 0 : index
      %c0_17 = arith.constant 0 : index
      %19 = vector.load %arg8[%c0_16, %c0_17] : memref<8x128xf32, #tpu.memory_space<vmem>>, vector<8x128xf32>
      tpu.vector_store %arg8[%c0_16, %c0_17], %18 {strides = array<i32>} : memref<8x128xf32, #tpu.memory_space<vmem>>, vector<8x128xf32>,
    } else {
    }
    %c0 = arith.constant 0 : index
    %c0_1 = arith.constant 0 : index
    %3 = vector.load %arg2[%c0, %c0_1] : memref<8x32xf32, #tpu.memory_space<vmem>>, vector<8x32xf32>
    %c0_2 = arith.constant 0 : index
    %c0_3 = arith.constant 0 : index
    %4 = vector.load %arg3[%c0_2, %c0_3] : memref<32x128xf32, #tpu.memory_space<vmem>>, vector<32x128xf32>
    %cst = arith.constant dense<0.000000e+00> : vector<8x128xf32>
    %5 = tpu.matmul %3, %4, %cst {dimension_numbers = #tpu.dot_dimension_numbers<[1], [0], [0], [1], [0, 0, 1, 1], [], []>} : vector<8x32xf32>, vector<32x128xf32>, vector<8x128xf32> -> vector<8x128xf32>
    %c0_4 = arith.constant 0 : index
    %c0_5 = arith.constant 0 : index
    %6 = vector.load %arg4[%c0_4, %c0_5] : memref<1x128xf32, #tpu.memory_space<vmem>>, vector<1x128xf32>
    %7 = vector.broadcast %6 : vector<1x128xf32> to vector<8x128xf32>
    %8 = arith.addf %5, %7 : vector<8x128xf32>
    %9 = math.tanh %8 : vector<8x128xf32>
    %c0_6 = arith.constant 0 : index
    %c0_7 = arith.constant 0 : index
    %10 = vector.load %arg8[%c0_6, %c0_7] : memref<8x128xf32, #tpu.memory_space<vmem>>, vector<8x128xf32>
    %c0_8 = arith.constant 0 : index
    %c0_9 = arith.constant 0 : index
    %11 = vector.load %arg5[%c0_8, %c0_9] : memref<128x128xf32, #tpu.memory_space<vmem>>, vector<128x128xf32>
    %cst_10 = arith.constant dense<0.000000e+00> : vector<8x128xf32>
    %12 = tpu.matmul %9, %11, %cst_10 {dimension_numbers = #tpu.dot_dimension_numbers<[1], [0], [0], [1], [0, 0, 1, 1], [], []>} : vector<8x128xf32>, vector<128x128xf32>, vector<8x128xf32> -> vector<8x128xf32>
    %13 = arith.addf %10, %12 : vector<8x128xf32>
    %c0_11 = arith.constant 0 : index
    %c0_12 = arith.constant 0 : index
    %14 = vector.load %arg8[%c0_11, %c0_12] : memref<8x128xf32, #tpu.memory_space<vmem>>, vector<8x128xf32>
    tpu.vector_store %arg8[%c0_11, %c0_12], %13 {strides = array<i32>} : memref<8x128xf32, #tpu.memory_space<vmem>>, vector<8x128xf32>,
    %c0_i32_13 = arith.constant 0 : i32
    %15 = arith.cmpi eq, %arg1, %c0_i32_13 : i32
    %16 = arith.extui %15 : i1 to i32
    %c0_i32_14 = arith.constant 0 : i32
    %17 = arith.cmpi ne, %16, %c0_i32_14 : i32
    scf.if %17 {
      %c0_15 = arith.constant 0 : index
      %c0_16 = arith.constant 0 : index
      %18 = vector.load %arg8[%c0_15, %c0_16] : memref<8x128xf32, #tpu.memory_space<vmem>>, vector<8x128xf32>
      %c0_17 = arith.constant 0 : index
      %c0_18 = arith.constant 0 : index
      %19 = vector.load %arg6[%c0_17, %c0_18] : memref<1x128xf32, #tpu.memory_space<vmem>>, vector<1x128xf32>
      %20 = vector.broadcast %19 : vector<1x128xf32> to vector<8x128xf32>
      %21 = arith.addf %18, %20 : vector<8x128xf32>
      %c0_19 = arith.constant 0 : index
      %c0_20 = arith.constant 0 : index
      %22 = vector.load %arg7[%c0_19, %c0_20] : memref<8x128xf32, #tpu.memory_space<vmem>>, vector<8x128xf32>
      tpu.vector_store %arg7[%c0_19, %c0_20], %21 {strides = array<i32>} : memref<8x128xf32, #tpu.memory_space<vmem>>, vector<8x128xf32>,
    } else {
    }
    return
  }
  func.func @transform_0(%arg0: i32, %arg1: i32) -> (i32, i32) {
    %c0_i32 = arith.constant 0 : i32
    %c0_i32_0 = arith.constant 0 : i32
    return %arg0, %c0_i32 : i32, i32
  }
  func.func @transform_1(%arg0: i32, %arg1: i32) -> (i32, i32) {
    %c0_i32 = arith.constant 0 : i32
    %c0_i32_0 = arith.constant 0 : i32
    return %c0_i32, %arg1 : i32, i32
  }
  func.func @transform_2(%arg0: i32, %arg1: i32) -> (i32, i32) {
    %c0_i32 = arith.constant 0 : i32
    %c0_i32_0 = arith.constant 0 : i32
    return %c0_i32, %arg1 : i32, i32
  }
  func.func @transform_3(%arg0: i32, %arg1: i32) -> (i32, i32) {
    %c0_i32 = arith.constant 0 : i32
    %c0_i32_0 = arith.constant 0 : i32
    return %arg1, %c0_i32 : i32, i32
  }
  func.func @transform_4(%arg0: i32, %arg1: i32) -> (i32, i32) {
    %c0_i32 = arith.constant 0 : i32
    %c0_i32_0 = arith.constant 0 : i32
    %c0_i32_1 = arith.constant 0 : i32
    return %c0_i32, %c0_i32_0 : i32, i32
  }
  func.func @transform_5(%arg0: i32, %arg1: i32) -> (i32, i32) {
    %c0_i32 = arith.constant 0 : i32
    %c0_i32_0 = arith.constant 0 : i32
    return %arg0, %c0_i32 : i32, i32
  }
}

</mosaic_0001>

<llo_original>
// kernel: _elm_forward_impl.1
$region0: #{_elm_forward_impl.1}
  #allocation0 [shape = 'u32[]', space=smem, size = 0x4, offset = 0x4, fixed_abs, tag = 'smem constant byte address 0x4 - core index']
  #allocation1 [shape = 'u32[144,128]{1,0:T(1,128)}', space=vmem, size = 0x12000, scoped, tag = 'internal scratch']
  #allocation2 [shape = 'f32[8,128]{1,0:T(8,128)}', space=vmem, size = 0x1000, scoped, tag = 'scratch operand']
  %s0 = inlined_call_operand.hbm [shape: f32[8,32], index: 0, kind: input, shape index: {}]
  %s1 = inlined_call_operand.hbm [shape: f32[32,128], index: 1, kind: input, shape index: {}]
  %s2 = inlined_call_operand.hbm [shape: f32[1,128], index: 2, kind: input, shape index: {}]
  %s3 = inlined_call_operand.hbm [shape: f32[128,128], index: 3, kind: input, shape index: {}]
  %s4 = inlined_call_operand.hbm [shape: f32[1,128], index: 4, kind: input, shape index: {}]
  %s5 = inlined_call_operand.hbm [shape: f32[8,128], index: 5, kind: output, shape index: {}]
  %s6 = sld [smem:[#allocation0]]
  $region58: #{_elm_forward_impl.1} parent=0
    _
  %s8 = ssub.s32 1, %s6
  %s9 = scalar_select 0, %s8, %s6
  $region1: #{_elm_forward_impl.1} parent=0
    #allocation3 [shape = 'u8[4096]{0}', space=vmem, size = 0x1000, scoped, tag = 'input window, operand 0, single buffered']
    #allocation4 [shape = 's32[1]{0}', space=sflag, size = 0x4, scoped, tag = 'scoped memory for _elm_forward_impl.1']
    #allocation5 [shape = 's32[1]{0}', space=sflag, size = 0x4, scoped, tag = 'scoped memory for _elm_forward_impl.1']
    #allocation6 [shape = 'u8[16384]{0}', space=vmem, size = 0x4000, scoped, tag = 'input window, operand 1, single buffered']
    #allocation7 [shape = 's32[1]{0}', space=sflag, size = 0x4, scoped, tag = 'scoped memory for _elm_forward_impl.1']
    #allocation8 [shape = 'u8[512]{0}', space=vmem, size = 0x400, scoped, tag = 'input window, operand 2, single buffered']
    #allocation9 [shape = 'u8[65536]{0}', space=vmem, size = 0x10000, scoped, tag = 'input window, operand 3, single buffered']
    #allocation10 [shape = 's32[1]{0}', space=sflag, size = 0x4, scoped, tag = 'scoped memory for _elm_forward_impl.1']
    #allocation11 [shape = 'u8[512]{0}', space=vmem, size = 0x400, scoped, tag = 'input window, operand 4, single buffered']
    #allocation12 [shape = 'u8[4096]{0}', space=vmem, size = 0x1000, scoped, tag = 'output window, operand 0, single buffered']
    %10 = vsyncpa [#allocation4], 0
    %11 = vsyncpa [#allocation7], 0
    %12 = vsyncpa [#allocation10], 0
    %13 = vsyncpa [#allocation5], 0
    // Predicated region
    $region2: #{_elm_forward_impl.1} parent=1 // pred_check
      _
    $region3: #{_elm_forward_impl.1} parent=1 // pred_check_branch
      %15 = sbr.rel (0) target = $region5
    $region4: #{_elm_forward_impl.1} parent=1 // pred_region
      %s17 = ssub.s32 128, 128
      %18 = vsyncadd [#allocation4], %s17
      %s20 = sshll.u32 [#allocation3], 4
      %s21 = int_to_ptr.vmem [resolvable:$true] %s20
      %23 = dma.hbm_to_vmem [thread:$0]  %s0, 128, %s21, [#allocation4]
    $region5: #{_elm_forward_impl.1} parent=1 // pred_fallthru
      _
    // Predicated region
    $region6: #{_elm_forward_impl.1} parent=1 // pred_check
      _
    $region7: #{_elm_forward_impl.1} parent=1 // pred_check_branch
      %25 = sbr.rel (0) target = $region9
    $region8: #{_elm_forward_impl.1} parent=1 // pred_region
      %s27 = ssub.s32 512, 512
      %28 = vsyncadd [#allocation7], %s27
      %s29 = sshll.u32 [#allocation6], 4
      %s30 = int_to_ptr.vmem [resolvable:$true] %s29
      %35 = dma.hbm_to_vmem [thread:$0]  %s1, 512, %s30, [#allocation7], 128, 128, 8
    $region9: #{_elm_forward_impl.1} parent=1 // pred_fallthru
      _
    // Predicated region
    $region10: #{_elm_forward_impl.1} parent=1 // pred_check
      _
    $region11: #{_elm_forward_impl.1} parent=1 // pred_check_branch
      %37 = sbr.rel (0) target = $region13
    $region12: #{_elm_forward_impl.1} parent=1 // pred_region
      %s39 = ssub.s32 16, 16
      %40 = vsyncadd [#allocation7], %s39
      %s42 = sshll.u32 [#allocation8], 4
      %s43 = int_to_ptr.vmem [resolvable:$true] %s42
      %45 = dma.hbm_to_vmem [thread:$0]  %s2, 16, %s43, [#allocation7]
    $region13: #{_elm_forward_impl.1} parent=1 // pred_fallthru
      _
    // Predicated region
    $region14: #{_elm_forward_impl.1} parent=1 // pred_check
      _
    $region15: #{_elm_forward_impl.1} parent=1 // pred_check_branch
      %47 = sbr.rel (0) target = $region17
    $region16: #{_elm_forward_impl.1} parent=1 // pred_region
      %s49 = ssub.s32 2048, 2048
      %50 = vsyncadd [#allocation10], %s49
      %s51 = sshll.u32 [#allocation9], 4
      %s52 = int_to_ptr.vmem [resolvable:$true] %s51
      %57 = dma.hbm_to_vmem [thread:$0]  %s3, 2048, %s52, [#allocation10], 128, 128, 8
    $region17: #{_elm_forward_impl.1} parent=1 // pred_fallthru
      _
    // Predicated region
    $region18: #{_elm_forward_impl.1} parent=1 // pred_check
      _
    $region19: #{_elm_forward_impl.1} parent=1 // pred_check_branch
      %59 = sbr.rel (0) target = $region21
    $region20: #{_elm_forward_impl.1} parent=1 // pred_region
      %s61 = ssub.s32 16, 16
      %62 = vsyncadd [#allocation10], %s61
      %s64 = sshll.u32 [#allocation11], 4
      %s65 = int_to_ptr.vmem [resolvable:$true] %s64
      %67 = dma.hbm_to_vmem [thread:$0]  %s4, 16, %s65, [#allocation10]
    $region21: #{_elm_forward_impl.1} parent=1 // pred_fallthru
      _
    // Predicated region
    $region22: #{_elm_forward_impl.1} parent=1 // pred_check
      _
    $region23: #{_elm_forward_impl.1} parent=1 // pred_check_branch
      %69 = sbr.rel (0) target = $region25
    $region24: #{_elm_forward_impl.1} parent=1 // pred_region
      %70 = dma.done [#allocation4], 128
    $region25: #{_elm_forward_impl.1} parent=1 // pred_fallthru
      _
    // Predicated region
    $region26: #{_elm_forward_impl.1} parent=1 // pred_check
      _
    $region27: #{_elm_forward_impl.1} parent=1 // pred_check_branch
      %72 = sbr.rel (0) target = $region29
    $region28: #{_elm_forward_impl.1} parent=1 // pred_region
      %73 = dma.done [#allocation7], 512
    $region29: #{_elm_forward_impl.1} parent=1 // pred_fallthru
      _
    // Predicated region
    $region30: #{_elm_forward_impl.1} parent=1 // pred_check
      _
    $region31: #{_elm_forward_impl.1} parent=1 // pred_check_branch
      %75 = sbr.rel (0) target = $region33
    $region32: #{_elm_forward_impl.1} parent=1 // pred_region
      %76 = dma.done [#allocation7], 16
    $region33: #{_elm_forward_impl.1} parent=1 // pred_fallthru
      _
    // Predicated region
    $region34: #{_elm_forward_impl.1} parent=1 // pred_check
      _
    $region35: #{_elm_forward_impl.1} parent=1 // pred_check_branch
      %78 = sbr.rel (0) target = $region37
    $region36: #{_elm_forward_impl.1} parent=1 // pred_region
      %79 = dma.done [#allocation10], 2048
    $region37: #{_elm_forward_impl.1} parent=1 // pred_fallthru
      _
    // Predicated region
    $region38: #{_elm_forward_impl.1} parent=1 // pred_check
      _
    $region39: #{_elm_forward_impl.1} parent=1 // pred_check_branch
      %81 = sbr.rel (0) target = $region41
    $region40: #{_elm_forward_impl.1} parent=1 // pred_region
      %82 = dma.done [#allocation10], 16
    $region41: #{_elm_forward_impl.1} parent=1 // pred_fallthru
      _
    %p83 = scmp.eq.s32.totalorder 0, 0
    // Predicated region
    $region42: #{_elm_forward_impl.1} parent=1 // pred_check
      %p84 = pneg %p83
    $region43: #{_elm_forward_impl.1} parent=1 // pred_check_branch
      %86 = sbr.rel (%p84) target = $region45
    $region44: #{_elm_forward_impl.1} parent=1 // pred_region
      %87 = vst [vmem:[#allocation2] sm:$0xff] 0.0
    $region45: #{_elm_forward_impl.1} parent=1 // pred_fallthru
      _
    %v88 = vld [vmem:[#allocation3] sm:$0xff]
    %v89 = vld [vmem:[#allocation6] sm:$0xff]
    %v90 = vld [vmem:[#allocation6 + $0x8] sm:$0xff]
    %v91 = vld [vmem:[#allocation6 + $0x10] sm:$0xff]
    %v92 = vld [vmem:[#allocation6 + $0x18] sm:$0xff]
    %v93 = vld [vmem:[#allocation8] sm:$0x1]
    %v95 = vlaneseq
    %v96 = vshrl.u32 %v95, 7
    %v97 = vsub.s32 0, %v96
    %v98 = vrot.slane %v93, %v97
    %vm100 = vcmask 261120
    %v102 = vsel %vm100, %v88, 0
    %104 = vmatprep.subr.mxu0 0.0
    %105 = vmatpush1.msra.mxu0 %v89
    %106 = vmatprep.subr.mxu0 0.0
    %107 = vmatpush1.msra.mxu0 %v90
    %108 = vmatprep.subr.mxu0 0.0
    %109 = vmatpush1.msra.mxu0 %v91
    %110 = vmatprep.subr.mxu0 0.0
    %111 = vmatpush1.msra.mxu0 %v92
    %112 = vmatprep.subr.mxu0 0.0
    %113 = vmatpush1.msra.mxu0 0.0
    %114 = vmatprep.subr.mxu0 0.0
    %115 = vmatpush1.msra.mxu0 0.0
    %116 = vmatprep.subr.mxu0 0.0
    %117 = vmatpush1.msra.mxu0 0.0
    %118 = vmatprep.subr.mxu0 0.0
    %119 = vmatpush1.msra.mxu0 0.0
    %120 = vmatprep.subr.mxu0 0.0
    %121 = vmatpush1.msra.mxu0 0.0
    %122 = vmatprep.subr.mxu0 0.0
    %123 = vmatpush1.msra.mxu0 0.0
    %124 = vmatprep.subr.mxu0 0.0
    %125 = vmatpush1.msra.mxu0 0.0
    %126 = vmatprep.subr.mxu0 0.0
    %127 = vmatpush1.msra.mxu0 0.0
    %128 = vmatprep.subr.mxu0 0.0
    %129 = vmatpush1.msra.mxu0 0.0
    %130 = vmatprep.subr.mxu0 0.0
    %131 = vmatpush1.msra.mxu0 0.0
    %132 = vmatprep.subr.mxu0 0.0
    %133 = vmatpush1.msra.mxu0 0.0
    %134 = vmatprep.subr.mxu0 0.0
    %135 = vmatpush1.msra.mxu0 0.0
    %136 = vmatprep.subr.mxu0 0.0
    %137 = vmatpush1.msra.mxu0 0.0
    %138 = vmatprep.subr.mxu0 0.0
    %139 = vmatpush1.msra.mxu0 0.0
    %140 = vmatprep.subr.mxu0 0.0
    %141 = vmatpush1.msra.mxu0 0.0
    %142 = vmatprep.subr.mxu0 0.0
    %143 = vmatpush1.msra.mxu0 0.0
    %144 = vmatprep.subr.mxu0 0.0
    %145 = vmatpush1.msra.mxu0 0.0
    %146 = vmatprep.subr.mxu0 0.0
    %147 = vmatpush1.msra.mxu0 0.0
    %148 = vmatprep.subr.mxu0 0.0
    %149 = vmatpush1.msra.mxu0 0.0
    %150 = vmatprep.subr.mxu0 0.0
    %151 = vmatpush1.msra.mxu0 0.0
    %152 = vmatprep.subr.mxu0 0.0
    %153 = vmatpush1.msra.mxu0 0.0
    %154 = vmatprep.subr.mxu0 0.0
    %155 = vmatpush1.msra.mxu0 0.0
    %156 = vmatprep.subr.mxu0 0.0
    %157 = vmatpush1.msra.mxu0 0.0
    %158 = vmatprep.subr.mxu0 0.0
    %159 = vmatpush1.msra.mxu0 0.0
    %160 = vmatprep.subr.mxu0 0.0
    %161 = vmatpush1.msra.mxu0 0.0
    %162 = vmatprep.subr.mxu0 0.0
    %163 = vmatpush1.msra.mxu0 0.0
    %164 = vmatprep.subr.mxu0 0.0
    %165 = vmatpush1.msra.mxu0 0.0
    %166 = vmatprep.subr.mxu0 0.0
    %167 = vmatpush1.msra.mxu0 0.0
    %168 = vmatprep.mubr.f32.mxu0 0.0
    %169 = vmatmul.mubr.f32.gmra.mrb[0].mxu0 %v102
    %v170 = vpop.f32.mrb[0].mxu0
    %v171 = vadd.f32 %v98, %v170
    %v172 = vpop.f32.mrb[0].mxu0
    %173 = vdwg.mxu0
    %v174 = vtanh.pop %v171
    %v175 = vld [vmem:[#allocation2] sm:$0xff]
    %v176 = vld [vmem:[#allocation9] sm:$0xff]
    %v177 = vld [vmem:[#allocation9 + $0x8] sm:$0xff]
    %v178 = vld [vmem:[#allocation9 + $0x10] sm:$0xff]
    %v179 = vld [vmem:[#allocation9 + $0x18] sm:$0xff]
    %v180 = vld [vmem:[#allocation9 + $0x20] sm:$0xff]
    %v181 = vld [vmem:[#allocation9 + $0x28] sm:$0xff]
    %v182 = vld [vmem:[#allocation9 + $0x30] sm:$0xff]
    %v183 = vld [vmem:[#allocation9 + $0x38] sm:$0xff]
    %v184 = vld [vmem:[#allocation9 + $0x40] sm:$0xff]
    %v185 = vld [vmem:[#allocation9 + $0x48] sm:$0xff]
    %v186 = vld [vmem:[#allocation9 + $0x50] sm:$0xff]
    %v187 = vld [vmem:[#allocation9 + $0x58] sm:$0xff]
    %v188 = vld [vmem:[#allocation9 + $0x60] sm:$0xff]
    %v189 = vld [vmem:[#allocation9 + $0x68] sm:$0xff]
    %v190 = vld [vmem:[#allocation9 + $0x70] sm:$0xff]
    %v191 = vld [vmem:[#allocation9 + $0x78] sm:$0xff]
    %192 = vmatprep.subr.mxu0 0.0
    %193 = vmatpush1.msra.mxu0 %v176
    %194 = vmatprep.subr.mxu0 0.0
    %195 = vmatpush1.msra.mxu0 %v177
    %196 = vmatprep.subr.mxu0 0.0
    %197 = vmatpush1.msra.mxu0 %v178
    %198 = vmatprep.subr.mxu0 0.0
    %199 = vmatpush1.msra.mxu0 %v179
    %200 = vmatprep.subr.mxu0 0.0
    %201 = vmatpush1.msra.mxu0 %v180
    %202 = vmatprep.subr.mxu0 0.0
    %203 = vmatpush1.msra.mxu0 %v181
    %204 = vmatprep.subr.mxu0 0.0
    %205 = vmatpush1.msra.mxu0 %v182
    %206 = vmatprep.subr.mxu0 0.0
    %207 = vmatpush1.msra.mxu0 %v183
    %208 = vmatprep.subr.mxu0 0.0
    %209 = vmatpush1.msra.mxu0 %v184
    %210 = vmatprep.subr.mxu0 0.0
    %211 = vmatpush1.msra.mxu0 %v185
    %212 = vmatprep.subr.mxu0 0.0
    %213 = vmatpush1.msra.mxu0 %v186
    %214 = vmatprep.subr.mxu0 0.0
    %215 = vmatpush1.msra.mxu0 %v187
    %216 = vmatprep.subr.mxu0 0.0
    %217 = vmatpush1.msra.mxu0 %v188
    %218 = vmatprep.subr.mxu0 0.0
    %219 = vmatpush1.msra.mxu0 %v189
    %220 = vmatprep.subr.mxu0 0.0
    %221 = vmatpush1.msra.mxu0 %v190
    %222 = vmatprep.subr.mxu0 0.0
    %223 = vmatpush1.msra.mxu0 %v191
    %224 = vmatprep.subr.mxu0 0.0
    %225 = vmatpush1.msra.mxu0 0.0
    %226 = vmatprep.subr.mxu0 0.0
    %227 = vmatpush1.msra.mxu0 0.0
    %228 = vmatprep.subr.mxu0 0.0
    %229 = vmatpush1.msra.mxu0 0.0
    %230 = vmatprep.subr.mxu0 0.0
    %231 = vmatpush1.msra.mxu0 0.0
    %232 = vmatprep.subr.mxu0 0.0
    %233 = vmatpush1.msra.mxu0 0.0
    %234 = vmatprep.subr.mxu0 0.0
    %235 = vmatpush1.msra.mxu0 0.0
    %236 = vmatprep.subr.mxu0 0.0
    %237 = vmatpush1.msra.mxu0 0.0
    %238 = vmatprep.subr.mxu0 0.0
    %239 = vmatpush1.msra.mxu0 0.0
    %240 = vmatprep.subr.mxu0 0.0
    %241 = vmatpush1.msra.mxu0 0.0
    %242 = vmatprep.subr.mxu0 0.0
    %243 = vmatpush1.msra.mxu0 0.0
    %244 = vmatprep.subr.mxu0 0.0
    %245 = vmatpush1.msra.mxu0 0.0
    %246 = vmatprep.subr.mxu0 0.0
    %247 = vmatpush1.msra.mxu0 0.0
    %248 = vmatprep.subr.mxu0 0.0
    %249 = vmatpush1.msra.mxu0 0.0
    %250 = vmatprep.subr.mxu0 0.0
    %251 = vmatpush1.msra.mxu0 0.0
    %252 = vmatprep.subr.mxu0 0.0
    %253 = vmatpush1.msra.mxu0 0.0
    %254 = vmatprep.subr.mxu0 0.0
    %255 = vmatpush1.msra.mxu0 0.0
    %256 = vmatprep.mubr.f32.mxu0 0.0
    %257 = vmatmul.mubr.f32.gmra.mrb[0].mxu0 %v174
    %v258 = vpop.f32.mrb[0].mxu0
    %v259 = vadd.f32 0.0, %v258
    %v260 = vpop.f32.mrb[0].mxu0
    %261 = vdwg.mxu0
    %v262 = vadd.f32 %v175, %v259
    %263 = vst [vmem:[#allocation2] sm:$0xff] %v262
    // Predicated region
    $region46: #{_elm_forward_impl.1} parent=1 // pred_check
      %p264 = pneg %p83
    $region47: #{_elm_forward_impl.1} parent=1 // pred_check_branch
      %266 = sbr.rel (%p264) target = $region49
    $region48: #{_elm_forward_impl.1} parent=1 // pred_region
      %v267 = vld [vmem:[#allocation2] sm:$0xff]
      %v268 = vld [vmem:[#allocation11] sm:$0x1]
      %v270 = vlaneseq
      %v271 = vshrl.u32 %v270, 7
      %v272 = vsub.s32 0, %v271
      %v273 = vrot.slane %v268, %v272
      %v275 = vadd.f32 %v267, %v273
      %276 = vst [vmem:[#allocation12] sm:$0xff] %v275
    $region49: #{_elm_forward_impl.1} parent=1 // pred_fallthru
      _
    // Predicated region
    $region50: #{_elm_forward_impl.1} parent=1 // pred_check
      _
    $region51: #{_elm_forward_impl.1} parent=1 // pred_check_branch
      %278 = sbr.rel (0) target = $region53
    $region52: #{_elm_forward_impl.1} parent=1 // pred_region
      %s280 = ssub.s32 128, 128
      %281 = vsyncadd [#allocation5], %s280
      %s283 = sshll.u32 [#allocation12], 4
      %s284 = int_to_ptr.vmem [resolvable:$true] %s283
      %286 = dma.vmem_to_hbm [thread:$0]  %s284, 128, %s5, [#allocation5]
    $region53: #{_elm_forward_impl.1} parent=1 // pred_fallthru
      _
    // Predicated region
    $region54: #{_elm_forward_impl.1} parent=1 // pred_check
      _
    $region55: #{_elm_forward_impl.1} parent=1 // pred_check_branch
      %288 = sbr.rel (0) target = $region57
    $region56: #{_elm_forward_impl.1} parent=1 // pred_region
      %289 = dma.done [#allocation5], 128
    $region57: #{_elm_forward_impl.1} parent=1 // pred_fallthru
      _
    %290 = vsyncpa [#allocation4], 1
    %291 = vsyncpa [#allocation7], 1
    %292 = vsyncpa [#allocation10], 1
    %293 = vsyncpa [#allocation5], 1

</llo_original>
